<compile_context>
chip_gen: v7x
topology: tpu7x:2x2x1
jax: 0.10.0
libtpu: 0.0.40
codegen_flags: <defaults>
</compile_context>

<pallas_src>
import jax
import jax.numpy as jnp
from jax.experimental import pallas as pl
from jax.experimental.pallas import tpu as pltpu

IN_F = 384          # fc1 input features (3 * 128, already lane-aligned)
H1, H2 = 64, 32     # logical hidden widths
LANE = 128          # lane-padded width used inside the kernel


def _round_up(v, m):
    return (v + m - 1) // m * m


def _mlp_kernel(x_ref, w1_ref, b1_ref, w2_ref, b2_ref, w3_ref, b3_ref, o_ref):
    # In-kernel cast of x to the compute dtype (no extra HBM pass in the wrapper).
    x = x_ref[...].astype(w1_ref.dtype)
    # fc1 + ReLU  (MXU accumulates in f32 regardless of operand dtype)
    h = jnp.dot(x, w1_ref[...], preferred_element_type=jnp.float32)
    h = jnp.maximum(h + b1_ref[...], 0.0).astype(w2_ref.dtype)
    # fc2 + ReLU  (padded rows/cols are zero -> exact)
    h = jnp.dot(h, w2_ref[...], preferred_element_type=jnp.float32)
    h = jnp.maximum(h + b2_ref[...], 0.0).astype(w3_ref.dtype)
    # fc3 (no activation); padded output columns are exactly 0
    h = jnp.dot(h, w3_ref[...], preferred_element_type=jnp.float32)
    o_ref[...] = (h + b3_ref[...]).astype(o_ref.dtype)


def classifier_multi_forward(x, params, *, compute_dtype=jnp.float32, tile_b=None,
                             return_padded=False):
    """x: (B, 384). params: w1 (384,64), b1 (64,), w2 (64,32), b2 (32,), w3 (32,C), b3 (C,).

    Weights are stored as (in_features, out_features), i.e. the transpose of the PyTorch
    Linear weight, so the kernel computes y = x @ W + b directly.
    """
    B, f_in = x.shape
    assert f_in == IN_F, f"expected {IN_F} input features, got {f_in}"
    num_classes = params["w3"].shape[1]

    # ---- Lane-pad narrow dims to 128 (zero padding is exact for this ReLU MLP).
    def pad2(a, rows, cols, dtype):
        r, c = a.shape
        return jnp.pad(a, ((0, rows - r), (0, cols - c))).astype(dtype)

    w1 = pad2(params["w1"], IN_F, LANE, compute_dtype)
    w2 = pad2(params["w2"], LANE, LANE, compute_dtype)
    w3 = pad2(params["w3"], LANE, LANE, compute_dtype)
    b1 = pad2(params["b1"].reshape(1, -1), 1, LANE, jnp.float32)
    b2 = pad2(params["b2"].reshape(1, -1), 1, LANE, jnp.float32)
    b3 = pad2(params["b3"].reshape(1, -1), 1, LANE, jnp.float32)

    # ---- Batch tile selection.
    # Default 4096 rows amortizes the ~0.35 us per-grid-step overhead; the tile is shrunk so
    # the "parallel" batch axis has >= 2 steps (feeds both TensorCores on megacore / v7x).
    # Footprint at 4096 (x 6 MiB x2 + out 2 MiB x2 + ~4 MiB intermediates + weights) is
    # ~21 MiB, well under the explicit 48 MiB VMEM limit set below (v7x physical = 64 MiB).
    if tile_b is None:
        tile_b = 4096
        while tile_b > 512 and pl.cdiv(B, tile_b) < 2:
            tile_b //= 2
    tile_b = max(8, _round_up(min(tile_b, _round_up(B, 8)), 8))

    grid = (pl.cdiv(B, tile_b),)

    x_bytes = jnp.dtype(x.dtype).itemsize
    w_bytes = jnp.dtype(compute_dtype).itemsize
    cost = pl.CostEstimate(
        flops=2 * B * (IN_F * LANE + LANE * LANE + LANE * LANE),
        transcendentals=0,
        bytes_accessed=(B * IN_F * x_bytes
                        + (w1.size + w2.size + w3.size) * w_bytes
                        + 3 * LANE * 4
                        + B * LANE * 4),
    )

    out_padded = pl.pallas_call(
        _mlp_kernel,
        out_shape=jax.ShapeDtypeStruct((B, LANE), jnp.float32),
        grid=grid,
        in_specs=[
            pl.BlockSpec((tile_b, IN_F), lambda i: (i, 0)),   # x: streamed per tile (ragged tail OK)
            pl.BlockSpec((IN_F, LANE), lambda i: (0, 0)),     # w1: VMEM-resident
            pl.BlockSpec((1, LANE), lambda i: (0, 0)),        # b1
            pl.BlockSpec((LANE, LANE), lambda i: (0, 0)),     # w2
            pl.BlockSpec((1, LANE), lambda i: (0, 0)),        # b2
            pl.BlockSpec((LANE, LANE), lambda i: (0, 0)),     # w3
            pl.BlockSpec((1, LANE), lambda i: (0, 0)),        # b3
        ],
        out_specs=pl.BlockSpec((tile_b, LANE), lambda i: (i, 0)),
        compiler_params=pltpu.CompilerParams(
            dimension_semantics=("parallel",),                # megacore / v7x 2-TC sharding
            vmem_limit_bytes=48 * 1024 * 1024,
        ),
        cost_estimate=cost,
    )(x, w1, b1, w2, b2, w3, b3)

    if return_padded:
        # Consumer can fuse the [:, :num_classes] index into its own op (columns beyond
        # num_classes are exactly 0).
        return out_padded
    # Lane padding of the class dimension is sliced away here; batch dim is already exact.
    return out_padded[:, :num_classes]


def init_params(key, num_classes=2):
    """Deterministic init matching the PyTorch module's parameter shapes (transposed)."""
    ks = jax.random.split(key, 6)

    def lin(kw, kb, fan_in, fan_out):
        bound = 1.0 / jnp.sqrt(fan_in)
        w = jax.random.uniform(kw, (fan_in, fan_out), jnp.float32, -bound, bound)
        b = jax.random.uniform(kb, (fan_out,), jnp.float32, -bound, bound)
        return w, b

    w1, b1 = lin(ks[0], ks[1], IN_F, H1)
    w2, b2 = lin(ks[2], ks[3], H1, H2)
    w3, b3 = lin(ks[4], ks[5], H2, num_classes)
    return {"w1": w1, "b1": b1, "w2": w2, "b2": b2, "w3": w3, "b3": b3}


def _reference(x, p):
    h = jnp.maximum(x @ p["w1"] + p["b1"], 0.0)
    h = jnp.maximum(h @ p["w2"] + p["b2"], 0.0)
    return h @ p["w3"] + p["b3"]


if __name__ == "__main__":
    key = jax.random.PRNGKey(0)
    k_x, k_p, k_x2 = jax.random.split(key, 3)

    B, num_classes = 8, 2
    x = jax.random.normal(k_x, (B, IN_F), jnp.float32)
    params = init_params(k_p, num_classes=num_classes)
    ref = _reference(x, params)

    # f32 path: matches the PyTorch module's forward semantics.
    out_f32 = jax.block_until_ready(classifier_multi_forward(x, params))
    assert out_f32.shape == (B, num_classes), out_f32.shape
    assert jnp.allclose(out_f32, ref, atol=1e-4, rtol=1e-4), "f32 mismatch vs reference"

    # bf16 weights path (x stays f32 in HBM; cast to bf16 only inside the kernel).
    out_bf16 = jax.block_until_ready(
        classifier_multi_forward(x, params, compute_dtype=jnp.bfloat16))
    assert out_bf16.shape == (B, num_classes)
    assert jnp.allclose(out_bf16, ref, atol=1e-1, rtol=5e-2), "bf16 mismatch vs reference"

    # Exercise the multi-step grid + ragged final block (B not a multiple of the tile).
    B2 = 200
    x2 = jax.random.normal(k_x2, (B2, IN_F), jnp.float32)
    ref2 = _reference(x2, params)
    out2 = jax.block_until_ready(classifier_multi_forward(x2, params, tile_b=64))
    assert out2.shape == (B2, num_classes)
    assert jnp.allclose(out2, ref2, atol=1e-4, rtol=1e-4), "tiled/ragged mismatch vs reference"

    # Padded-output path (consumer-side slicing): columns >= num_classes are exactly 0.
    out_pad = jax.block_until_ready(classifier_multi_forward(x, params, return_padded=True))
    assert out_pad.shape == (B, LANE)
    assert jnp.allclose(out_pad[:, :num_classes], ref, atol=1e-4, rtol=1e-4)
    assert jnp.all(out_pad[:, num_classes:] == 0.0)

    print("KERNEL_OK")
</pallas_src>

<mosaic_0001>
module attributes {stable_mosaic.version = 11 : i64} {
  func.func @_mlp_kernel(%arg0: i32, %arg1: memref<8x384xf32, #tpu.memory_space<vmem>>, %arg2: memref<384x128xf32, #tpu.memory_space<vmem>>, %arg3: memref<1x128xf32, #tpu.memory_space<vmem>>, %arg4: memref<128x128xf32, #tpu.memory_space<vmem>>, %arg5: memref<1x128xf32, #tpu.memory_space<vmem>>, %arg6: memref<128x128xf32, #tpu.memory_space<vmem>>, %arg7: memref<1x128xf32, #tpu.memory_space<vmem>>, %arg8: memref<8x128xf32, #tpu.memory_space<vmem>>) attributes {dimension_semantics = [#tpu.dimension_semantics<parallel>], iteration_bounds = array<i64: 1>, scalar_prefetch = 0 : i64, scratch_operands = 0 : i64, tpu.core_type = #tpu.core_type<tc>, window_params = [{transform_indices = @transform_0, window_bounds = array<i64: 8, 384>}, {pipeline_mode = #tpu.pipeline_mode<synchronous>, transform_indices = @transform_1, window_bounds = array<i64: 384, 128>}, {pipeline_mode = #tpu.pipeline_mode<synchronous>, transform_indices = @transform_2, window_bounds = array<i64: 1, 128>}, {pipeline_mode = #tpu.pipeline_mode<synchronous>, transform_indices = @transform_3, window_bounds = array<i64: 128, 128>}, {pipeline_mode = #tpu.pipeline_mode<synchronous>, transform_indices = @transform_4, window_bounds = array<i64: 1, 128>}, {pipeline_mode = #tpu.pipeline_mode<synchronous>, transform_indices = @transform_5, window_bounds = array<i64: 128, 128>}, {pipeline_mode = #tpu.pipeline_mode<synchronous>, transform_indices = @transform_6, window_bounds = array<i64: 1, 128>}, {transform_indices = @transform_7, window_bounds = array<i64: 8, 128>}]} {
    %c0 = arith.constant 0 : index
    %c0_0 = arith.constant 0 : index
    %0 = vector.load %arg1[%c0, %c0_0] : memref<8x384xf32, #tpu.memory_space<vmem>>, vector<8x384xf32>
    %c0_1 = arith.constant 0 : index
    %c0_2 = arith.constant 0 : index
    %1 = vector.load %arg2[%c0_1, %c0_2] : memref<384x128xf32, #tpu.memory_space<vmem>>, vector<384x128xf32>
    %cst = arith.constant dense<0.000000e+00> : vector<8x128xf32>
    %2 = tpu.matmul %0, %1, %cst {dimension_numbers = #tpu.dot_dimension_numbers<[1], [0], [0], [1], [0, 0, 1, 1], [], []>} : vector<8x384xf32>, vector<384x128xf32>, vector<8x128xf32> -> vector<8x128xf32>
    %c0_3 = arith.constant 0 : index
    %c0_4 = arith.constant 0 : index
    %3 = vector.load %arg3[%c0_3, %c0_4] : memref<1x128xf32, #tpu.memory_space<vmem>>, vector<1x128xf32>
    %4 = vector.broadcast %3 : vector<1x128xf32> to vector<8x128xf32>
    %5 = arith.addf %2, %4 : vector<8x128xf32>
    %cst_5 = arith.constant 0.000000e+00 : f32
    %6 = vector.broadcast %cst_5 : f32 to vector<8x128xf32>
    %7 = arith.maximumf %5, %6 : vector<8x128xf32>
    %c0_6 = arith.constant 0 : index
    %c0_7 = arith.constant 0 : index
    %8 = vector.load %arg4[%c0_6, %c0_7] : memref<128x128xf32, #tpu.memory_space<vmem>>, vector<128x128xf32>
    %cst_8 = arith.constant dense<0.000000e+00> : vector<8x128xf32>
    %9 = tpu.matmul %7, %8, %cst_8 {dimension_numbers = #tpu.dot_dimension_numbers<[1], [0], [0], [1], [0, 0, 1, 1], [], []>} : vector<8x128xf32>, vector<128x128xf32>, vector<8x128xf32> -> vector<8x128xf32>
    %c0_9 = arith.constant 0 : index
    %c0_10 = arith.constant 0 : index
    %10 = vector.load %arg5[%c0_9, %c0_10] : memref<1x128xf32, #tpu.memory_space<vmem>>, vector<1x128xf32>
    %11 = vector.broadcast %10 : vector<1x128xf32> to vector<8x128xf32>
    %12 = arith.addf %9, %11 : vector<8x128xf32>
    %cst_11 = arith.constant 0.000000e+00 : f32
    %13 = vector.broadcast %cst_11 : f32 to vector<8x128xf32>
    %14 = arith.maximumf %12, %13 : vector<8x128xf32>
    %c0_12 = arith.constant 0 : index
    %c0_13 = arith.constant 0 : index
    %15 = vector.load %arg6[%c0_12, %c0_13] : memref<128x128xf32, #tpu.memory_space<vmem>>, vector<128x128xf32>
    %cst_14 = arith.constant dense<0.000000e+00> : vector<8x128xf32>
    %16 = tpu.matmul %14, %15, %cst_14 {dimension_numbers = #tpu.dot_dimension_numbers<[1], [0], [0], [1], [0, 0, 1, 1], [], []>} : vector<8x128xf32>, vector<128x128xf32>, vector<8x128xf32> -> vector<8x128xf32>
    %c0_15 = arith.constant 0 : index
    %c0_16 = arith.constant 0 : index
    %17 = vector.load %arg7[%c0_15, %c0_16] : memref<1x128xf32, #tpu.memory_space<vmem>>, vector<1x128xf32>
    %18 = vector.broadcast %17 : vector<1x128xf32> to vector<8x128xf32>
    %19 = arith.addf %16, %18 : vector<8x128xf32>
    %c0_17 = arith.constant 0 : index
    %c0_18 = arith.constant 0 : index
    %20 = vector.load %arg8[%c0_17, %c0_18] : memref<8x128xf32, #tpu.memory_space<vmem>>, vector<8x128xf32>
    tpu.vector_store %arg8[%c0_17, %c0_18], %19 {strides = array<i32>} : memref<8x128xf32, #tpu.memory_space<vmem>>, vector<8x128xf32>,
    return
  }
  func.func @transform_0(%arg0: i32) -> (i32, i32) {
    %c0_i32 = arith.constant 0 : i32
    %c0_i32_0 = arith.constant 0 : i32
    return %arg0, %c0_i32 : i32, i32
  }
  func.func @transform_1(%arg0: i32) -> (i32, i32) {
    %c0_i32 = arith.constant 0 : i32
    %c0_i32_0 = arith.constant 0 : i32
    %c0_i32_1 = arith.constant 0 : i32
    return %c0_i32, %c0_i32_0 : i32, i32
  }
  func.func @transform_2(%arg0: i32) -> (i32, i32) {
    %c0_i32 = arith.constant 0 : i32
    %c0_i32_0 = arith.constant 0 : i32
    %c0_i32_1 = arith.constant 0 : i32
    return %c0_i32, %c0_i32_0 : i32, i32
  }
  func.func @transform_3(%arg0: i32) -> (i32, i32) {
    %c0_i32 = arith.constant 0 : i32
    %c0_i32_0 = arith.constant 0 : i32
    %c0_i32_1 = arith.constant 0 : i32
    return %c0_i32, %c0_i32_0 : i32, i32
  }
  func.func @transform_4(%arg0: i32) -> (i32, i32) {
    %c0_i32 = arith.constant 0 : i32
    %c0_i32_0 = arith.constant 0 : i32
    %c0_i32_1 = arith.constant 0 : i32
    return %c0_i32, %c0_i32_0 : i32, i32
  }
  func.func @transform_5(%arg0: i32) -> (i32, i32) {
    %c0_i32 = arith.constant 0 : i32
    %c0_i32_0 = arith.constant 0 : i32
    %c0_i32_1 = arith.constant 0 : i32
    return %c0_i32, %c0_i32_0 : i32, i32
  }
  func.func @transform_6(%arg0: i32) -> (i32, i32) {
    %c0_i32 = arith.constant 0 : i32
    %c0_i32_0 = arith.constant 0 : i32
    %c0_i32_1 = arith.constant 0 : i32
    return %c0_i32, %c0_i32_0 : i32, i32
  }
  func.func @transform_7(%arg0: i32) -> (i32, i32) {
    %c0_i32 = arith.constant 0 : i32
    %c0_i32_0 = arith.constant 0 : i32
    return %arg0, %c0_i32 : i32, i32
  }
}

</mosaic_0001>

<llo_original>
// kernel: tpu_custom_call.1
$region0: #{tpu_custom_call.1}
  #allocation0 [shape = 'u32[]', space=smem, size = 0x4, offset = 0x4, fixed_abs, tag = 'smem constant byte address 0x4 - core index']
  #allocation1 [shape = 'u32[144,128]{1,0:T(1,128)}', space=vmem, size = 0x12000, scoped, tag = 'internal scratch']
  %s0 = inlined_call_operand.hbm [shape: f32[8,384], index: 0, kind: input, shape index: {}]
  %s1 = inlined_call_operand.hbm [shape: f32[384,128], index: 1, kind: input, shape index: {}]
  %s2 = inlined_call_operand.vmem [shape: f32[1,128], index: 2, kind: input, shape index: {}]
  %s3 = inlined_call_operand.hbm [shape: f32[128,128], index: 3, kind: input, shape index: {}]
  %s4 = inlined_call_operand.vmem [shape: f32[1,128], index: 4, kind: input, shape index: {}]
  %s5 = inlined_call_operand.hbm [shape: f32[128,128], index: 5, kind: input, shape index: {}]
  %s6 = inlined_call_operand.vmem [shape: f32[1,128], index: 6, kind: input, shape index: {}]
  %s7 = inlined_call_operand.hbm [shape: f32[8,128], index: 7, kind: output, shape index: {}]
  %s8 = sld [smem:[#allocation0]]
  $region54: #{tpu_custom_call.1} parent=0
    _
  %s10 = ssub.s32 1, %s8
  %s11 = scalar_select 0, %s10, %s8
  $region1: #{tpu_custom_call.1} parent=0
    #allocation2 [shape = 'u8[12288]{0}', space=vmem, size = 0x3000, scoped, tag = 'input window, operand 0, single buffered']
    #allocation3 [shape = 's32[1]{0}', space=sflag, size = 0x4, scoped, tag = 'scoped memory for tpu_custom_call.1']
    #allocation4 [shape = 's32[1]{0}', space=sflag, size = 0x4, scoped, tag = 'scoped memory for tpu_custom_call.1']
    #allocation5 [shape = 'u8[196608]{0}', space=vmem, size = 0x30000, scoped, tag = 'input window, operand 1, single buffered']
    #allocation6 [shape = 's32[1]{0}', space=sflag, size = 0x4, scoped, tag = 'scoped memory for tpu_custom_call.1']
    #allocation7 [shape = 'u8[65536]{0}', space=vmem, size = 0x10000, scoped, tag = 'input window, operand 3, single buffered']
    #allocation8 [shape = 'u8[65536]{0}', space=vmem, size = 0x10000, scoped, tag = 'input window, operand 5, single buffered']
    #allocation9 [shape = 's32[1]{0}', space=sflag, size = 0x4, scoped, tag = 'scoped memory for tpu_custom_call.1']
    #allocation10 [shape = 'u8[4096]{0}', space=vmem, size = 0x1000, scoped, tag = 'output window, operand 0, single buffered']
    %12 = vsyncpa [#allocation3], 0
    %13 = vsyncpa [#allocation6], 0
    %14 = vsyncpa [#allocation9], 0
    %15 = vsyncpa [#allocation4], 0
    // Predicated region
    $region2: #{tpu_custom_call.1} parent=1 // pred_check
      _
    $region3: #{tpu_custom_call.1} parent=1 // pred_check_branch
      %17 = sbr.rel (0) target = $region5
    $region4: #{tpu_custom_call.1} parent=1 // pred_region
      %s19 = ssub.s32 384, 384
      %20 = vsyncadd [#allocation3], %s19
      %s22 = sshll.u32 [#allocation2], 4
      %s23 = int_to_ptr.vmem [resolvable:$true] %s22
      %25 = dma.hbm_to_vmem [thread:$0]  %s0, 384, %s23, [#allocation3]
    $region5: #{tpu_custom_call.1} parent=1 // pred_fallthru
      _
    // Predicated region
    $region6: #{tpu_custom_call.1} parent=1 // pred_check
      _
    $region7: #{tpu_custom_call.1} parent=1 // pred_check_branch
      %27 = sbr.rel (0) target = $region9
    $region8: #{tpu_custom_call.1} parent=1 // pred_region
      %s29 = ssub.s32 6144, 6144
      %30 = vsyncadd [#allocation6], %s29
      %s31 = sshll.u32 [#allocation5], 4
      %s32 = int_to_ptr.vmem [resolvable:$true] %s31
      %37 = dma.hbm_to_vmem [thread:$0]  %s1, 6144, %s32, [#allocation6], 128, 128, 8
    $region9: #{tpu_custom_call.1} parent=1 // pred_fallthru
      _
    // Predicated region
    $region10: #{tpu_custom_call.1} parent=1 // pred_check
      _
    $region11: #{tpu_custom_call.1} parent=1 // pred_check_branch
      %39 = sbr.rel (0) target = $region13
    $region12: #{tpu_custom_call.1} parent=1 // pred_region
      _
    $region13: #{tpu_custom_call.1} parent=1 // pred_fallthru
      _
    // Predicated region
    $region14: #{tpu_custom_call.1} parent=1 // pred_check
      _
    $region15: #{tpu_custom_call.1} parent=1 // pred_check_branch
      %41 = sbr.rel (0) target = $region17
    $region16: #{tpu_custom_call.1} parent=1 // pred_region
      %s43 = ssub.s32 2048, 2048
      %44 = vsyncadd [#allocation6], %s43
      %s45 = sshll.u32 [#allocation7], 4
      %s46 = int_to_ptr.vmem [resolvable:$true] %s45
      %51 = dma.hbm_to_vmem [thread:$0]  %s3, 2048, %s46, [#allocation6], 128, 128, 8
    $region17: #{tpu_custom_call.1} parent=1 // pred_fallthru
      _
    // Predicated region
    $region18: #{tpu_custom_call.1} parent=1 // pred_check
      _
    $region19: #{tpu_custom_call.1} parent=1 // pred_check_branch
      %53 = sbr.rel (0) target = $region21
    $region20: #{tpu_custom_call.1} parent=1 // pred_region
      _
    $region21: #{tpu_custom_call.1} parent=1 // pred_fallthru
      _
    // Predicated region
    $region22: #{tpu_custom_call.1} parent=1 // pred_check
      _
    $region23: #{tpu_custom_call.1} parent=1 // pred_check_branch
      %55 = sbr.rel (0) target = $region25
    $region24: #{tpu_custom_call.1} parent=1 // pred_region
      %s57 = ssub.s32 2048, 2048
      %58 = vsyncadd [#allocation9], %s57
      %s59 = sshll.u32 [#allocation8], 4
      %s60 = int_to_ptr.vmem [resolvable:$true] %s59
      %65 = dma.hbm_to_vmem [thread:$0]  %s5, 2048, %s60, [#allocation9], 128, 128, 8
    $region25: #{tpu_custom_call.1} parent=1 // pred_fallthru
      _
    // Predicated region
    $region26: #{tpu_custom_call.1} parent=1 // pred_check
      _
    $region27: #{tpu_custom_call.1} parent=1 // pred_check_branch
      %67 = sbr.rel (0) target = $region29
    $region28: #{tpu_custom_call.1} parent=1 // pred_region
      _
    $region29: #{tpu_custom_call.1} parent=1 // pred_fallthru
      _
    // Predicated region
    $region30: #{tpu_custom_call.1} parent=1 // pred_check
      _
    $region31: #{tpu_custom_call.1} parent=1 // pred_check_branch
      %69 = sbr.rel (0) target = $region33
    $region32: #{tpu_custom_call.1} parent=1 // pred_region
      %70 = dma.done [#allocation3], 384
    $region33: #{tpu_custom_call.1} parent=1 // pred_fallthru
      _
    // Predicated region
    $region34: #{tpu_custom_call.1} parent=1 // pred_check
      _
    $region35: #{tpu_custom_call.1} parent=1 // pred_check_branch
      %72 = sbr.rel (0) target = $region37
    $region36: #{tpu_custom_call.1} parent=1 // pred_region
      %73 = dma.done [#allocation6], 6144
    $region37: #{tpu_custom_call.1} parent=1 // pred_fallthru
      _
    // Predicated region
    $region38: #{tpu_custom_call.1} parent=1 // pred_check
      _
    $region39: #{tpu_custom_call.1} parent=1 // pred_check_branch
      %75 = sbr.rel (0) target = $region41
    $region40: #{tpu_custom_call.1} parent=1 // pred_region
      %76 = dma.done [#allocation6], 2048
    $region41: #{tpu_custom_call.1} parent=1 // pred_fallthru
      _
    // Predicated region
    $region42: #{tpu_custom_call.1} parent=1 // pred_check
      _
    $region43: #{tpu_custom_call.1} parent=1 // pred_check_branch
      %78 = sbr.rel (0) target = $region45
    $region44: #{tpu_custom_call.1} parent=1 // pred_region
      %79 = dma.done [#allocation9], 2048
    $region45: #{tpu_custom_call.1} parent=1 // pred_fallthru
      _
    %v80 = vld [vmem:[#allocation2] sm:$0xff]
    %v81 = vld [vmem:[#allocation2 + $0x8] sm:$0xff]
    %v82 = vld [vmem:[#allocation2 + $0x10] sm:$0xff]
    %v83 = vld [vmem:[#allocation5] sm:$0xff]
    %v84 = vld [vmem:[#allocation5 + $0x8] sm:$0xff]
    %v85 = vld [vmem:[#allocation5 + $0x10] sm:$0xff]
    %v86 = vld [vmem:[#allocation5 + $0x18] sm:$0xff]
    %v87 = vld [vmem:[#allocation5 + $0x20] sm:$0xff]
    %v88 = vld [vmem:[#allocation5 + $0x28] sm:$0xff]
    %v89 = vld [vmem:[#allocation5 + $0x30] sm:$0xff]
    %v90 = vld [vmem:[#allocation5 + $0x38] sm:$0xff]
    %v91 = vld [vmem:[#allocation5 + $0x40] sm:$0xff]
    %v92 = vld [vmem:[#allocation5 + $0x48] sm:$0xff]
    %v93 = vld [vmem:[#allocation5 + $0x50] sm:$0xff]
    %v94 = vld [vmem:[#allocation5 + $0x58] sm:$0xff]
    %v95 = vld [vmem:[#allocation5 + $0x60] sm:$0xff]
    %v96 = vld [vmem:[#allocation5 + $0x68] sm:$0xff]
    %v97 = vld [vmem:[#allocation5 + $0x70] sm:$0xff]
    %v98 = vld [vmem:[#allocation5 + $0x78] sm:$0xff]
    %v99 = vld [vmem:[#allocation5 + $0x80] sm:$0xff]
    %v100 = vld [vmem:[#allocation5 + $0x88] sm:$0xff]
    %v101 = vld [vmem:[#allocation5 + $0x90] sm:$0xff]
    %v102 = vld [vmem:[#allocation5 + $0x98] sm:$0xff]
    %v103 = vld [vmem:[#allocation5 + $0xa0] sm:$0xff]
    %v104 = vld [vmem:[#allocation5 + $0xa8] sm:$0xff]
    %v105 = vld [vmem:[#allocation5 + $0xb0] sm:$0xff]
    %v106 = vld [vmem:[#allocation5 + $0xb8] sm:$0xff]
    %v107 = vld [vmem:[#allocation5 + $0xc0] sm:$0xff]
    %v108 = vld [vmem:[#allocation5 + $0xc8] sm:$0xff]
    %v109 = vld [vmem:[#allocation5 + $0xd0] sm:$0xff]
    %v110 = vld [vmem:[#allocation5 + $0xd8] sm:$0xff]
    %v111 = vld [vmem:[#allocation5 + $0xe0] sm:$0xff]
    %v112 = vld [vmem:[#allocation5 + $0xe8] sm:$0xff]
    %v113 = vld [vmem:[#allocation5 + $0xf0] sm:$0xff]
    %v114 = vld [vmem:[#allocation5 + $0xf8] sm:$0xff]
    %v115 = vld [vmem:[#allocation5 + $0x100] sm:$0xff]
    %v116 = vld [vmem:[#allocation5 + $0x108] sm:$0xff]
    %v117 = vld [vmem:[#allocation5 + $0x110] sm:$0xff]
    %v118 = vld [vmem:[#allocation5 + $0x118] sm:$0xff]
    %v119 = vld [vmem:[#allocation5 + $0x120] sm:$0xff]
    %v120 = vld [vmem:[#allocation5 + $0x128] sm:$0xff]
    %v121 = vld [vmem:[#allocation5 + $0x130] sm:$0xff]
    %v122 = vld [vmem:[#allocation5 + $0x138] sm:$0xff]
    %v123 = vld [vmem:[#allocation5 + $0x140] sm:$0xff]
    %v124 = vld [vmem:[#allocation5 + $0x148] sm:$0xff]
    %v125 = vld [vmem:[#allocation5 + $0x150] sm:$0xff]
    %v126 = vld [vmem:[#allocation5 + $0x158] sm:$0xff]
    %v127 = vld [vmem:[#allocation5 + $0x160] sm:$0xff]
    %v128 = vld [vmem:[#allocation5 + $0x168] sm:$0xff]
    %v129 = vld [vmem:[#allocation5 + $0x170] sm:$0xff]
    %v130 = vld [vmem:[#allocation5 + $0x178] sm:$0xff]
    %v131 = vld [vmem:[%s2] sm:$0x1]
    %v133 = vlaneseq
    %v134 = vshrl.u32 %v133, 7
    %v135 = vsub.s32 0, %v134
    %v136 = vrot.slane %v131, %v135
    %138 = vmatprep.subr.mxu0 0.0
    %139 = vmatpush1.msra.mxu0 %v83
    %140 = vmatprep.subr.mxu0 0.0
    %141 = vmatpush1.msra.mxu0 %v84
    %142 = vmatprep.subr.mxu0 0.0
    %143 = vmatpush1.msra.mxu0 %v85
    %144 = vmatprep.subr.mxu0 0.0
    %145 = vmatpush1.msra.mxu0 %v86
    %146 = vmatprep.subr.mxu0 0.0
    %147 = vmatpush1.msra.mxu0 %v87
    %148 = vmatprep.subr.mxu0 0.0
    %149 = vmatpush1.msra.mxu0 %v88
    %150 = vmatprep.subr.mxu0 0.0
    %151 = vmatpush1.msra.mxu0 %v89
    %152 = vmatprep.subr.mxu0 0.0
    %153 = vmatpush1.msra.mxu0 %v90
    %154 = vmatprep.subr.mxu0 0.0
    %155 = vmatpush1.msra.mxu0 %v91
    %156 = vmatprep.subr.mxu0 0.0
    %157 = vmatpush1.msra.mxu0 %v92
    %158 = vmatprep.subr.mxu0 0.0
    %159 = vmatpush1.msra.mxu0 %v93
    %160 = vmatprep.subr.mxu0 0.0
    %161 = vmatpush1.msra.mxu0 %v94
    %162 = vmatprep.subr.mxu0 0.0
    %163 = vmatpush1.msra.mxu0 %v95
    %164 = vmatprep.subr.mxu0 0.0
    %165 = vmatpush1.msra.mxu0 %v96
    %166 = vmatprep.subr.mxu0 0.0
    %167 = vmatpush1.msra.mxu0 %v97
    %168 = vmatprep.subr.mxu0 0.0
    %169 = vmatpush1.msra.mxu0 %v98
    %170 = vmatprep.subr.mxu0 0.0
    %171 = vmatpush1.msra.mxu0 %v99
    %172 = vmatprep.subr.mxu0 0.0
    %173 = vmatpush1.msra.mxu0 %v100
    %174 = vmatprep.subr.mxu0 0.0
    %175 = vmatpush1.msra.mxu0 %v101
    %176 = vmatprep.subr.mxu0 0.0
    %177 = vmatpush1.msra.mxu0 %v102
    %178 = vmatprep.subr.mxu0 0.0
    %179 = vmatpush1.msra.mxu0 %v103
    %180 = vmatprep.subr.mxu0 0.0
    %181 = vmatpush1.msra.mxu0 %v104
    %182 = vmatprep.subr.mxu0 0.0
    %183 = vmatpush1.msra.mxu0 %v105
    %184 = vmatprep.subr.mxu0 0.0
    %185 = vmatpush1.msra.mxu0 %v106
    %186 = vmatprep.subr.mxu0 0.0
    %187 = vmatpush1.msra.mxu0 %v107
    %188 = vmatprep.subr.mxu0 0.0
    %189 = vmatpush1.msra.mxu0 %v108
    %190 = vmatprep.subr.mxu0 0.0
    %191 = vmatpush1.msra.mxu0 %v109
    %192 = vmatprep.subr.mxu0 0.0
    %193 = vmatpush1.msra.mxu0 %v110
    %194 = vmatprep.subr.mxu0 0.0
    %195 = vmatpush1.msra.mxu0 %v111
    %196 = vmatprep.subr.mxu0 0.0
    %197 = vmatpush1.msra.mxu0 %v112
    %198 = vmatprep.subr.mxu0 0.0
    %199 = vmatpush1.msra.mxu0 %v113
    %200 = vmatprep.subr.mxu0 0.0
    %201 = vmatpush1.msra.mxu0 %v114
    %202 = vmatprep.mubr.f32.mxu0 %v81
    %203 = vmatmul.mubr.f32.gmra.mrb[0].mxu0 %v80
    %v204 = vpop.f32.mrb[0].mxu0
    %v205 = vadd.f32 %v136, %v204
    %v206 = vpop.f32.mrb[0].mxu0
    %207 = vdwg.mxu0
    %208 = vmatprep.subr.mxu0 0.0
    %209 = vmatpush1.msra.mxu0 %v115
    %210 = vmatprep.subr.mxu0 0.0
    %211 = vmatpush1.msra.mxu0 %v116
    %212 = vmatprep.subr.mxu0 0.0
    %213 = vmatpush1.msra.mxu0 %v117
    %214 = vmatprep.subr.mxu0 0.0
    %215 = vmatpush1.msra.mxu0 %v118
    %216 = vmatprep.subr.mxu0 0.0
    %217 = vmatpush1.msra.mxu0 %v119
    %218 = vmatprep.subr.mxu0 0.0
    %219 = vmatpush1.msra.mxu0 %v120
    %220 = vmatprep.subr.mxu0 0.0
    %221 = vmatpush1.msra.mxu0 %v121
    %222 = vmatprep.subr.mxu0 0.0
    %223 = vmatpush1.msra.mxu0 %v122
    %224 = vmatprep.subr.mxu0 0.0
    %225 = vmatpush1.msra.mxu0 %v123
    %226 = vmatprep.subr.mxu0 0.0
    %227 = vmatpush1.msra.mxu0 %v124
    %228 = vmatprep.subr.mxu0 0.0
    %229 = vmatpush1.msra.mxu0 %v125
    %230 = vmatprep.subr.mxu0 0.0
    %231 = vmatpush1.msra.mxu0 %v126
    %232 = vmatprep.subr.mxu0 0.0
    %233 = vmatpush1.msra.mxu0 %v127
    %234 = vmatprep.subr.mxu0 0.0
    %235 = vmatpush1.msra.mxu0 %v128
    %236 = vmatprep.subr.mxu0 0.0
    %237 = vmatpush1.msra.mxu0 %v129
    %238 = vmatprep.subr.mxu0 0.0
    %239 = vmatpush1.msra.mxu0 %v130
    %240 = vmatprep.subr.mxu0 0.0
    %241 = vmatpush1.msra.mxu0 0.0
    %242 = vmatprep.subr.mxu0 0.0
    %243 = vmatpush1.msra.mxu0 0.0
    %244 = vmatprep.subr.mxu0 0.0
    %245 = vmatpush1.msra.mxu0 0.0
    %246 = vmatprep.subr.mxu0 0.0
    %247 = vmatpush1.msra.mxu0 0.0
    %248 = vmatprep.subr.mxu0 0.0
    %249 = vmatpush1.msra.mxu0 0.0
    %250 = vmatprep.subr.mxu0 0.0
    %251 = vmatpush1.msra.mxu0 0.0
    %252 = vmatprep.subr.mxu0 0.0
    %253 = vmatpush1.msra.mxu0 0.0
    %254 = vmatprep.subr.mxu0 0.0
    %255 = vmatpush1.msra.mxu0 0.0
    %256 = vmatprep.subr.mxu0 0.0
    %257 = vmatpush1.msra.mxu0 0.0
    %258 = vmatprep.subr.mxu0 0.0
    %259 = vmatpush1.msra.mxu0 0.0
    %260 = vmatprep.subr.mxu0 0.0
    %261 = vmatpush1.msra.mxu0 0.0
    %262 = vmatprep.subr.mxu0 0.0
    %263 = vmatpush1.msra.mxu0 0.0
    %264 = vmatprep.subr.mxu0 0.0
    %265 = vmatpush1.msra.mxu0 0.0
    %266 = vmatprep.subr.mxu0 0.0
    %267 = vmatpush1.msra.mxu0 0.0
    %268 = vmatprep.subr.mxu0 0.0
    %269 = vmatpush1.msra.mxu0 0.0
    %270 = vmatprep.subr.mxu0 0.0
    %271 = vmatpush1.msra.mxu0 0.0
    %272 = vmatprep.mubr.f32.mxu0 0.0
    %273 = vmatmul.mubr.f32.gmra.mrb[0].mxu0 %v82
    %v274 = vpop.f32.mrb[0].mxu0
    %v275 = vadd.f32 %v205, %v274
    %v276 = vpop.f32.mrb[0].mxu0
    %277 = vdwg.mxu0
    %v278 = vmax.f32 %v275, 0.0
    %v279 = vld [vmem:[#allocation7] sm:$0xff]
    %v280 = vld [vmem:[#allocation7 + $0x8] sm:$0xff]
    %v281 = vld [vmem:[#allocation7 + $0x10] sm:$0xff]
    %v282 = vld [vmem:[#allocation7 + $0x18] sm:$0xff]
    %v283 = vld [vmem:[#allocation7 + $0x20] sm:$0xff]
    %v284 = vld [vmem:[#allocation7 + $0x28] sm:$0xff]
    %v285 = vld [vmem:[#allocation7 + $0x30] sm:$0xff]
    %v286 = vld [vmem:[#allocation7 + $0x38] sm:$0xff]
    %v287 = vld [vmem:[#allocation7 + $0x40] sm:$0xff]
    %v288 = vld [vmem:[#allocation7 + $0x48] sm:$0xff]
    %v289 = vld [vmem:[#allocation7 + $0x50] sm:$0xff]
    %v290 = vld [vmem:[#allocation7 + $0x58] sm:$0xff]
    %v291 = vld [vmem:[#allocation7 + $0x60] sm:$0xff]
    %v292 = vld [vmem:[#allocation7 + $0x68] sm:$0xff]
    %v293 = vld [vmem:[#allocation7 + $0x70] sm:$0xff]
    %v294 = vld [vmem:[#allocation7 + $0x78] sm:$0xff]
    %v295 = vld [vmem:[%s4] sm:$0x1]
    %v297 = vlaneseq
    %v298 = vshrl.u32 %v297, 7
    %v299 = vsub.s32 0, %v298
    %v300 = vrot.slane %v295, %v299
    %302 = vmatprep.subr.mxu0 0.0
    %303 = vmatpush1.msra.mxu0 %v279
    %304 = vmatprep.subr.mxu0 0.0
    %305 = vmatpush1.msra.mxu0 %v280
    %306 = vmatprep.subr.mxu0 0.0
    %307 = vmatpush1.msra.mxu0 %v281
    %308 = vmatprep.subr.mxu0 0.0
    %309 = vmatpush1.msra.mxu0 %v282
    %310 = vmatprep.subr.mxu0 0.0
    %311 = vmatpush1.msra.mxu0 %v283
    %312 = vmatprep.subr.mxu0 0.0
    %313 = vmatpush1.msra.mxu0 %v284
    %314 = vmatprep.subr.mxu0 0.0
    %315 = vmatpush1.msra.mxu0 %v285
    %316 = vmatprep.subr.mxu0 0.0
    %317 = vmatpush1.msra.mxu0 %v286
    %318 = vmatprep.subr.mxu0 0.0
    %319 = vmatpush1.msra.mxu0 %v287
    %320 = vmatprep.subr.mxu0 0.0
    %321 = vmatpush1.msra.mxu0 %v288
    %322 = vmatprep.subr.mxu0 0.0
    %323 = vmatpush1.msra.mxu0 %v289
    %324 = vmatprep.subr.mxu0 0.0
    %325 = vmatpush1.msra.mxu0 %v290
    %326 = vmatprep.subr.mxu0 0.0
    %327 = vmatpush1.msra.mxu0 %v291
    %328 = vmatprep.subr.mxu0 0.0
    %329 = vmatpush1.msra.mxu0 %v292
    %330 = vmatprep.subr.mxu0 0.0
    %331 = vmatpush1.msra.mxu0 %v293
    %332 = vmatprep.subr.mxu0 0.0
    %333 = vmatpush1.msra.mxu0 %v294
    %334 = vmatprep.subr.mxu0 0.0
    %335 = vmatpush1.msra.mxu0 0.0
    %336 = vmatprep.subr.mxu0 0.0
    %337 = vmatpush1.msra.mxu0 0.0
    %338 = vmatprep.subr.mxu0 0.0
    %339 = vmatpush1.msra.mxu0 0.0
    %340 = vmatprep.subr.mxu0 0.0
    %341 = vmatpush1.msra.mxu0 0.0
    %342 = vmatprep.subr.mxu0 0.0
    %343 = vmatpush1.msra.mxu0 0.0
    %344 = vmatprep.subr.mxu0 0.0
    %345 = vmatpush1.msra.mxu0 0.0
    %346 = vmatprep.subr.mxu0 0.0
    %347 = vmatpush1.msra.mxu0 0.0
    %348 = vmatprep.subr.mxu0 0.0
    %349 = vmatpush1.msra.mxu0 0.0
    %350 = vmatprep.subr.mxu0 0.0
    %351 = vmatpush1.msra.mxu0 0.0
    %352 = vmatprep.subr.mxu0 0.0
    %353 = vmatpush1.msra.mxu0 0.0
    %354 = vmatprep.subr.mxu0 0.0
    %355 = vmatpush1.msra.mxu0 0.0
    %356 = vmatprep.subr.mxu0 0.0
    %357 = vmatpush1.msra.mxu0 0.0
    %358 = vmatprep.subr.mxu0 0.0
    %359 = vmatpush1.msra.mxu0 0.0
    %360 = vmatprep.subr.mxu0 0.0
    %361 = vmatpush1.msra.mxu0 0.0
    %362 = vmatprep.subr.mxu0 0.0
    %363 = vmatpush1.msra.mxu0 0.0
    %364 = vmatprep.subr.mxu0 0.0
    %365 = vmatpush1.msra.mxu0 0.0
    %366 = vmatprep.mubr.f32.mxu0 0.0
    %367 = vmatmul.mubr.f32.gmra.mrb[0].mxu0 %v278
    %v368 = vpop.f32.mrb[0].mxu0
    %v369 = vadd.f32 %v300, %v368
    %v370 = vpop.f32.mrb[0].mxu0
    %371 = vdwg.mxu0
    %v372 = vmax.f32 %v369, 0.0
    %v373 = vld [vmem:[#allocation8] sm:$0xff]
    %v374 = vld [vmem:[#allocation8 + $0x8] sm:$0xff]
    %v375 = vld [vmem:[#allocation8 + $0x10] sm:$0xff]
    %v376 = vld [vmem:[#allocation8 + $0x18] sm:$0xff]
    %v377 = vld [vmem:[#allocation8 + $0x20] sm:$0xff]
    %v378 = vld [vmem:[#allocation8 + $0x28] sm:$0xff]
    %v379 = vld [vmem:[#allocation8 + $0x30] sm:$0xff]
    %v380 = vld [vmem:[#allocation8 + $0x38] sm:$0xff]
    %v381 = vld [vmem:[#allocation8 + $0x40] sm:$0xff]
    %v382 = vld [vmem:[#allocation8 + $0x48] sm:$0xff]
    %v383 = vld [vmem:[#allocation8 + $0x50] sm:$0xff]
    %v384 = vld [vmem:[#allocation8 + $0x58] sm:$0xff]
    %v385 = vld [vmem:[#allocation8 + $0x60] sm:$0xff]
    %v386 = vld [vmem:[#allocation8 + $0x68] sm:$0xff]
    %v387 = vld [vmem:[#allocation8 + $0x70] sm:$0xff]
    %v388 = vld [vmem:[#allocation8 + $0x78] sm:$0xff]
    %v389 = vld [vmem:[%s6] sm:$0x1]
    %v391 = vlaneseq
    %v392 = vshrl.u32 %v391, 7
    %v393 = vsub.s32 0, %v392
    %v394 = vrot.slane %v389, %v393
    %396 = vmatprep.subr.mxu0 0.0
    %397 = vmatpush1.msra.mxu0 %v373
    %398 = vmatprep.subr.mxu0 0.0
    %399 = vmatpush1.msra.mxu0 %v374
    %400 = vmatprep.subr.mxu0 0.0
    %401 = vmatpush1.msra.mxu0 %v375
    %402 = vmatprep.subr.mxu0 0.0
    %403 = vmatpush1.msra.mxu0 %v376
    %404 = vmatprep.subr.mxu0 0.0
    %405 = vmatpush1.msra.mxu0 %v377
    %406 = vmatprep.subr.mxu0 0.0
    %407 = vmatpush1.msra.mxu0 %v378
    %408 = vmatprep.subr.mxu0 0.0
    %409 = vmatpush1.msra.mxu0 %v379
    %410 = vmatprep.subr.mxu0 0.0
    %411 = vmatpush1.msra.mxu0 %v380
    %412 = vmatprep.subr.mxu0 0.0
    %413 = vmatpush1.msra.mxu0 %v381
    %414 = vmatprep.subr.mxu0 0.0
    %415 = vmatpush1.msra.mxu0 %v382
    %416 = vmatprep.subr.mxu0 0.0
    %417 = vmatpush1.msra.mxu0 %v383
    %418 = vmatprep.subr.mxu0 0.0
    %419 = vmatpush1.msra.mxu0 %v384
    %420 = vmatprep.subr.mxu0 0.0
    %421 = vmatpush1.msra.mxu0 %v385
    %422 = vmatprep.subr.mxu0 0.0
    %423 = vmatpush1.msra.mxu0 %v386
    %424 = vmatprep.subr.mxu0 0.0
    %425 = vmatpush1.msra.mxu0 %v387
    %426 = vmatprep.subr.mxu0 0.0
    %427 = vmatpush1.msra.mxu0 %v388
    %428 = vmatprep.subr.mxu0 0.0
    %429 = vmatpush1.msra.mxu0 0.0
    %430 = vmatprep.subr.mxu0 0.0
    %431 = vmatpush1.msra.mxu0 0.0
    %432 = vmatprep.subr.mxu0 0.0
    %433 = vmatpush1.msra.mxu0 0.0
    %434 = vmatprep.subr.mxu0 0.0
    %435 = vmatpush1.msra.mxu0 0.0
    %436 = vmatprep.subr.mxu0 0.0
    %437 = vmatpush1.msra.mxu0 0.0
    %438 = vmatprep.subr.mxu0 0.0
    %439 = vmatpush1.msra.mxu0 0.0
    %440 = vmatprep.subr.mxu0 0.0
    %441 = vmatpush1.msra.mxu0 0.0
    %442 = vmatprep.subr.mxu0 0.0
    %443 = vmatpush1.msra.mxu0 0.0
    %444 = vmatprep.subr.mxu0 0.0
    %445 = vmatpush1.msra.mxu0 0.0
    %446 = vmatprep.subr.mxu0 0.0
    %447 = vmatpush1.msra.mxu0 0.0
    %448 = vmatprep.subr.mxu0 0.0
    %449 = vmatpush1.msra.mxu0 0.0
    %450 = vmatprep.subr.mxu0 0.0
    %451 = vmatpush1.msra.mxu0 0.0
    %452 = vmatprep.subr.mxu0 0.0
    %453 = vmatpush1.msra.mxu0 0.0
    %454 = vmatprep.subr.mxu0 0.0
    %455 = vmatpush1.msra.mxu0 0.0
    %456 = vmatprep.subr.mxu0 0.0
    %457 = vmatpush1.msra.mxu0 0.0
    %458 = vmatprep.subr.mxu0 0.0
    %459 = vmatpush1.msra.mxu0 0.0
    %460 = vmatprep.mubr.f32.mxu0 0.0
    %461 = vmatmul.mubr.f32.gmra.mrb[0].mxu0 %v372
    %v462 = vpop.f32.mrb[0].mxu0
    %v463 = vadd.f32 %v394, %v462
    %v464 = vpop.f32.mrb[0].mxu0
    %465 = vdwg.mxu0
    %466 = vst [vmem:[#allocation10] sm:$0xff] %v463
    // Predicated region
    $region46: #{tpu_custom_call.1} parent=1 // pred_check
      _
    $region47: #{tpu_custom_call.1} parent=1 // pred_check_branch
      %468 = sbr.rel (0) target = $region49
    $region48: #{tpu_custom_call.1} parent=1 // pred_region
      %s470 = ssub.s32 128, 128
      %471 = vsyncadd [#allocation4], %s470
      %s473 = sshll.u32 [#allocation10], 4
      %s474 = int_to_ptr.vmem [resolvable:$true] %s473
      %476 = dma.vmem_to_hbm [thread:$0]  %s474, 128, %s7, [#allocation4]
    $region49: #{tpu_custom_call.1} parent=1 // pred_fallthru
      _
    // Predicated region
    $region50: #{tpu_custom_call.1} parent=1 // pred_check
      _
    $region51: #{tpu_custom_call.1} parent=1 // pred_check_branch
      %478 = sbr.rel (0) target = $region53
    $region52: #{tpu_custom_call.1} parent=1 // pred_region
      %479 = dma.done [#allocation4], 128
    $region53: #{tpu_custom_call.1} parent=1 // pred_fallthru
      _
    %480 = vsyncpa [#allocation3], 1
    %481 = vsyncpa [#allocation6], 1
    %482 = vsyncpa [#allocation9], 1
    %483 = vsyncpa [#allocation4], 1

</llo_original>
